<compile_context>
chip_gen: v6e
topology: v6e:2x2x1
jax: 0.10.0
libtpu: 0.0.40
codegen_flags: <defaults>
</compile_context>

<pallas_src>
import jax
import jax.numpy as jnp
from jax.experimental import pallas as pl
from jax.experimental.pallas import tpu as pltpu

P_DROP = 0.5  # torch.nn.functional.dropout default (training=True)


def _sdp_like_kernel(x1_ref, x2_ref, drop_ref, o_ref):
    # x1_ref: (Bb, M, K)  x2_ref: (Bb, K, N)  drop_ref: (Bb, M, N) bf16 {0, 1/(1-p)}
    a = x1_ref[...].astype(jnp.bfloat16)
    b = x2_ref[...].astype(jnp.bfloat16)

    # v1 = x1 @ x2 : bf16 MXU inputs, f32 accumulation.
    v1 = jnp.einsum("bmk,bkn->bmn", a, b, preferred_element_type=jnp.float32)

    # v2 = dropout(v1): mask pre-folded into a 0 / 1/(1-p) scale -> a single VPU mul.
    v2 = v1 * drop_ref[...].astype(jnp.float32)
    # Cast v1 to bf16 now; the f32 copy is dead past this point.
    v1_b = v1.astype(jnp.bfloat16)

    # v3 = softmax(v2, axis=-1) in f32.
    m = jnp.max(v2, axis=-1, keepdims=True)
    e = jnp.exp(v2 - m)
    s = jnp.sum(e, axis=-1, keepdims=True)
    # Per-row reciprocal then broadcast multiply (M divides instead of M*N).
    # TODO(synk): pl.reciprocal(s, approx=True) on TPU-only builds (EUP slot).
    v3_b = (e * (1.0 / s)).astype(jnp.bfloat16)

    # v4 = v3 @ v1  (pre-dropout v1, exactly as in the torch module); bf16 MXU, f32 acc.
    v4 = jnp.einsum("bmn,bnq->bmq", v3_b, v1_b, preferred_element_type=jnp.float32)
    o_ref[...] = v4.astype(o_ref.dtype)


def _pick_block_b(B, max_bb=8):
    """Pack batch elements per grid step to amortize the ~0.35us/step overhead,
    preferring an even number of grid steps with >= 2 steps per TensorCore
    (>= 4 total) so v7x's two cores stay balanced and pipelining has >1 step."""
    divisors = [d for d in range(1, min(max_bb, B) + 1) if B % d == 0]
    for min_steps, need_even in ((4, True), (2, True), (2, False), (1, False)):
        cands = [d for d in divisors
                 if (B // d) >= min_steps and (not need_even or (B // d) % 2 == 0)]
        if cands:
            return max(cands)
    return 1


def model_forward(x1, x2, dropout_key=None, p_drop=P_DROP, block_b=None):
    B, M, K = x1.shape
    B2, K2, N = x2.shape
    assert B == B2 and K == K2
    # torch's second matmul (B,M,N) @ (B,M,N) is only shape-valid when N == M.
    assert M == N, "forward is only shape-valid when the score matrix is square"

    # Dropout keep-mask folded into a bf16 scale (0.0 or 1/(1-p); both exact for p=0.5).
    # NOTE: fixed mask if the caller omits the key (demo only, wrong for training).
    if dropout_key is None:
        dropout_key = jax.random.PRNGKey(0)
    keep = jax.random.bernoulli(dropout_key, 1.0 - p_drop, (B, M, N))
    drop_scale = (keep.astype(jnp.float32) * (1.0 / (1.0 - p_drop))).astype(jnp.bfloat16)

    if block_b is None:
        block_b = _pick_block_b(B)
    assert B % block_b == 0
    grid = (B // block_b,)

    out_dtype = x1.dtype
    in_isize = jnp.dtype(x1.dtype).itemsize
    out_isize = jnp.dtype(out_dtype).itemsize

    # Explicit VMEM budget: double-buffered in/out blocks + intermediates, 2x headroom,
    # floored at the default scoped limit and capped at v7x's 64 MiB physical VMEM.
    in_bytes = block_b * (M * K + K * N) * in_isize
    mask_bytes = block_b * M * N * 2
    out_bytes = block_b * M * N * out_isize
    interm_bytes = block_b * M * N * (4 + 2 + 4 + 4 + 2)  # v1 f32/bf16, e f32, v4 f32, v3 bf16
    vmem_limit = 2 * (in_bytes + mask_bytes + out_bytes) + interm_bytes
    vmem_limit = int(min(64 * 1024 * 1024, max(32 * 1024 * 1024, 2 * vmem_limit)))

    cost = pl.CostEstimate(
        flops=2 * B * (M * K * N + M * N * N),
        transcendentals=B * M * N,  # exp in the softmax
        bytes_accessed=B * ((M * K + K * N) * in_isize + M * N * 2 + M * N * out_isize),
    )

    # NOTE: for large M/N add an M grid axis (stage v1 in a VMEM scratch or recompute)
    # and 256-aligned tiles to fill the 256x256 MXU on v6e/v7x; at these shapes one
    # per-batch block is already lane-dense (last dim = 128) and the kernel is
    # memory-bound, so per-batch blocking is the right granularity.
    return pl.pallas_call(
        _sdp_like_kernel,
        out_shape=jax.ShapeDtypeStruct((B, M, N), out_dtype),
        grid=grid,
        in_specs=[
            pl.BlockSpec((block_b, M, K), lambda b: (b, 0, 0)),
            pl.BlockSpec((block_b, K, N), lambda b: (b, 0, 0)),
            pl.BlockSpec((block_b, M, N), lambda b: (b, 0, 0)),
        ],
        out_specs=pl.BlockSpec((block_b, M, N), lambda b: (b, 0, 0)),
        compiler_params=pltpu.CompilerParams(
            dimension_semantics=("parallel",),  # independent per-batch work
            vmem_limit_bytes=vmem_limit,
        ),
        cost_estimate=cost,
    )(x1, x2, drop_scale)


def _reference(x1, x2, drop_scale):
    """Pure-JAX f32 reference of the torch forward (same dropout mask)."""
    hp = jax.lax.Precision.HIGHEST
    v1 = jnp.einsum("bmk,bkn->bmn", x1, x2, precision=hp)
    v2 = v1 * drop_scale
    v3 = jax.nn.softmax(v2, axis=-1)
    return jnp.einsum("bmn,bnq->bmq", v3, v1, precision=hp)


if __name__ == "__main__":
    # Small shapes consistent with the module's batched-matmul structure
    # (square score matrix so v3 @ v1 is well defined).  Inputs are scaled so the
    # softmax logits are O(1): this is the regime where the documented bf16-MXU
    # precision contract is meaningful (unit-scale inputs with large K make the
    # softmax an argmax, where any rounding can flip the selected row).
    B, M, K = 8, 128, 128
    N = M

    key = jax.random.PRNGKey(0)
    k1, k2, k3 = jax.random.split(key, 3)
    x1 = 0.2 * jax.random.normal(k1, (B, M, K), dtype=jnp.float32)
    x2 = 0.2 * jax.random.normal(k2, (B, K, N), dtype=jnp.float32)

    out = model_forward(x1, x2, dropout_key=k3)
    out = jax.block_until_ready(out)

    assert out.shape == (B, M, N)
    assert bool(jnp.all(jnp.isfinite(out)))

    # Check against an exact-f32 reference built with the same dropout mask.
    keep = jax.random.bernoulli(k3, 1.0 - P_DROP, (B, M, N))
    drop_scale = keep.astype(jnp.float32) * (1.0 / (1.0 - P_DROP))
    ref = _reference(x1, x2, drop_scale)
    err = float(jnp.max(jnp.abs(out - ref)))
    assert bool(jnp.allclose(out, ref, rtol=5e-2, atol=5e-2)), f"max abs err = {err}"

    print("KERNEL_OK")
</pallas_src>

<mosaic_0001>
module attributes {stable_mosaic.version = 11 : i64} {
  func.func @_sdp_like_kernel(%arg0: i32, %arg1: memref<2x128x128xf32, #tpu.memory_space<vmem>>, %arg2: memref<2x128x128xf32, #tpu.memory_space<vmem>>, %arg3: memref<2x128x128xbf16, #tpu.memory_space<vmem>>, %arg4: memref<2x128x128xf32, #tpu.memory_space<vmem>>) attributes {dimension_semantics = [#tpu.dimension_semantics<parallel>], iteration_bounds = array<i64: 4>, scalar_prefetch = 0 : i64, scratch_operands = 0 : i64, tpu.core_type = #tpu.core_type<tc>, window_params = [{transform_indices = @transform_0, window_bounds = array<i64: 2, 128, 128>}, {transform_indices = @transform_1, window_bounds = array<i64: 2, 128, 128>}, {transform_indices = @transform_2, window_bounds = array<i64: 2, 128, 128>}, {transform_indices = @transform_3, window_bounds = array<i64: 2, 128, 128>}]} {
    %c0 = arith.constant 0 : index
    %c0_0 = arith.constant 0 : index
    %c0_1 = arith.constant 0 : index
    %0 = vector.load %arg1[%c0, %c0_0, %c0_1] : memref<2x128x128xf32, #tpu.memory_space<vmem>>, vector<2x128x128xf32>
    %1 = arith.truncf %0 : vector<2x128x128xf32> to vector<2x128x128xbf16>
    %c0_2 = arith.constant 0 : index
    %c0_3 = arith.constant 0 : index
    %c0_4 = arith.constant 0 : index
    %2 = vector.load %arg2[%c0_2, %c0_3, %c0_4] : memref<2x128x128xf32, #tpu.memory_space<vmem>>, vector<2x128x128xf32>
    %3 = arith.truncf %2 : vector<2x128x128xf32> to vector<2x128x128xbf16>
    "tpu.trace_start"() <{level = 10 : i32, message = "bmk,bkn->bmn"}> : () -> ()
    %cst = arith.constant dense<0.000000e+00> : vector<2x128x128xf32>
    %4 = tpu.matmul %1, %3, %cst {dimension_numbers = #tpu.dot_dimension_numbers<[2], [1], [1], [2], [0, 0, 0, 1, 1, 2], [0], [0]>} : vector<2x128x128xbf16>, vector<2x128x128xbf16>, vector<2x128x128xf32> -> vector<2x128x128xf32>
    "tpu.trace_stop"() : () -> ()
    %c0_5 = arith.constant 0 : index
    %c0_6 = arith.constant 0 : index
    %c0_7 = arith.constant 0 : index
    %5 = vector.load %arg3[%c0_5, %c0_6, %c0_7] : memref<2x128x128xbf16, #tpu.memory_space<vmem>>, vector<2x128x128xbf16>
    %6 = arith.extf %5 : vector<2x128x128xbf16> to vector<2x128x128xf32>
    %7 = arith.mulf %4, %6 : vector<2x128x128xf32>
    %8 = arith.truncf %4 : vector<2x128x128xf32> to vector<2x128x128xbf16>
    %cst_8 = arith.constant dense<0xFF800000> : vector<2x128xf32>
    %9 = vector.multi_reduction <maximumf>, %7, %cst_8 [2] : vector<2x128x128xf32> to vector<2x128xf32>
    %10 = vector.shape_cast %9 : vector<2x128xf32> to vector<2x128x1xf32>
    %11 = vector.broadcast %10 : vector<2x128x1xf32> to vector<2x128x128xf32>
    %12 = arith.subf %7, %11 : vector<2x128x128xf32>
    %13 = math.exp %12 : vector<2x128x128xf32>
    %cst_9 = arith.constant dense<0.000000e+00> : vector<2x128xf32>
    %14 = vector.multi_reduction <add>, %13, %cst_9 [2] : vector<2x128x128xf32> to vector<2x128xf32>
    %15 = vector.shape_cast %14 : vector<2x128xf32> to vector<2x128x1xf32>
    %cst_10 = arith.constant 1.000000e+00 : f32
    %16 = vector.broadcast %cst_10 : f32 to vector<2x128x1xf32>
    %17 = arith.divf %16, %15 : vector<2x128x1xf32>
    %18 = vector.broadcast %17 : vector<2x128x1xf32> to vector<2x128x128xf32>
    %19 = arith.mulf %13, %18 : vector<2x128x128xf32>
    %20 = arith.truncf %19 : vector<2x128x128xf32> to vector<2x128x128xbf16>
    "tpu.trace_start"() <{level = 10 : i32, message = "bmn,bnq->bmq"}> : () -> ()
    %cst_11 = arith.constant dense<0.000000e+00> : vector<2x128x128xf32>
    %21 = tpu.matmul %20, %8, %cst_11 {dimension_numbers = #tpu.dot_dimension_numbers<[2], [1], [1], [2], [0, 0, 0, 1, 1, 2], [0], [0]>} : vector<2x128x128xbf16>, vector<2x128x128xbf16>, vector<2x128x128xf32> -> vector<2x128x128xf32>
    "tpu.trace_stop"() : () -> ()
    %c0_12 = arith.constant 0 : index
    %c0_13 = arith.constant 0 : index
    %c0_14 = arith.constant 0 : index
    %22 = vector.load %arg4[%c0_12, %c0_13, %c0_14] : memref<2x128x128xf32, #tpu.memory_space<vmem>>, vector<2x128x128xf32>
    tpu.vector_store %arg4[%c0_12, %c0_13, %c0_14], %21 {strides = array<i32>} : memref<2x128x128xf32, #tpu.memory_space<vmem>>, vector<2x128x128xf32>,
    return
  }
  func.func @transform_0(%arg0: i32) -> (i32, i32, i32) {
    %c0_i32 = arith.constant 0 : i32
    %c0_i32_0 = arith.constant 0 : i32
    %c0_i32_1 = arith.constant 0 : i32
    return %arg0, %c0_i32, %c0_i32_0 : i32, i32, i32
  }
  func.func @transform_1(%arg0: i32) -> (i32, i32, i32) {
    %c0_i32 = arith.constant 0 : i32
    %c0_i32_0 = arith.constant 0 : i32
    %c0_i32_1 = arith.constant 0 : i32
    return %arg0, %c0_i32, %c0_i32_0 : i32, i32, i32
  }
  func.func @transform_2(%arg0: i32) -> (i32, i32, i32) {
    %c0_i32 = arith.constant 0 : i32
    %c0_i32_0 = arith.constant 0 : i32
    %c0_i32_1 = arith.constant 0 : i32
    return %arg0, %c0_i32, %c0_i32_0 : i32, i32, i32
  }
  func.func @transform_3(%arg0: i32) -> (i32, i32, i32) {
    %c0_i32 = arith.constant 0 : i32
    %c0_i32_0 = arith.constant 0 : i32
    %c0_i32_1 = arith.constant 0 : i32
    return %arg0, %c0_i32, %c0_i32_0 : i32, i32, i32
  }
}

</mosaic_0001>

<llo_original>
// kernel: tpu_custom_call.1
$region0: #{tpu_custom_call.1}
  #allocation0 [shape = 'u32[]', space=smem, size = 0x4, offset = 0x4, fixed_abs, tag = 'smem constant byte address 0x4 - core index']
  #allocation1 [shape = 'u32[144,128]{1,0:T(1,128)}', space=vmem, size = 0x12000, scoped, tag = 'internal scratch']
  %s0 = inlined_call_operand.hbm [shape: f32[8,128,128], index: 0, kind: input, shape index: {}]
  %s1 = inlined_call_operand.hbm [shape: f32[8,128,128], index: 1, kind: input, shape index: {}]
  %s2 = inlined_call_operand.hbm [shape: bf16[8,128,128], index: 2, kind: input, shape index: {}]
  %s3 = inlined_call_operand.hbm [shape: f32[8,128,128], index: 3, kind: output, shape index: {}]
  %s4 = sld [smem:[#allocation0]]
  $region57: #{tpu_custom_call.1} parent=0
    _
  %s6 = ssub.s32 1, %s4
  %s7 = scalar_select 0, %s6, %s4
  $region1: #{tpu_custom_call.1} parent=0
    #allocation2 [shape = 'u8[262144]{0}', space=vmem, size = 0x40000, scoped, tag = 'input window, operand 0']
    #allocation3 [shape = 's32[2]{0}', space=sflag, size = 0x8, scoped, tag = 'scoped memory for tpu_custom_call.1']
    #allocation4 [shape = 's32[2]{0}', space=sflag, size = 0x8, scoped, tag = 'scoped memory for tpu_custom_call.1']
    #allocation5 [shape = 'u8[262144]{0}', space=vmem, size = 0x40000, scoped, tag = 'input window, operand 1']
    #allocation6 [shape = 's32[2]{0}', space=sflag, size = 0x8, scoped, tag = 'scoped memory for tpu_custom_call.1']
    #allocation7 [shape = 'u8[131072]{0}', space=vmem, size = 0x20000, scoped, tag = 'input window, operand 2']
    #allocation8 [shape = 'u8[262144]{0}', space=vmem, size = 0x40000, scoped, tag = 'output window, operand 0']
    %8 = vsyncpa [#allocation3], 0
    %s9 = scalar_lea.sflag [#allocation3], 1
    %10 = vsyncpa %s9, 0
    %11 = vsyncpa [#allocation6], 0
    %s12 = scalar_lea.sflag [#allocation6], 1
    %13 = vsyncpa %s12, 0
    %14 = vsyncpa [#allocation4], 0
    %s15 = scalar_lea.sflag [#allocation4], 1
    %16 = vsyncpa %s15, 0
    loop: start=0, step=1, limit=6
    $region2: #{tpu_custom_call.1} parent=1 // loop_pre_header
      _
    $region3: #{tpu_custom_call.1} parent=1 // loop_header
      %s18 = sphi 0, %s22
      %p19 = scmp.ge.s32.totalorder %s18, 6
      %s28 = sphi 0, %s30
      %s31 = sphi 0, %s28
      %s32 = sphi 0, %s31
      %s48 = sphi 0, %s32
      %s54 = sphi 0, %s56
      %s57 = sphi 0, %s54
      %s58 = sphi 0, %s57
      %s74 = sphi 0, %s58
      %s80 = sphi 0, %s82
      %s83 = sphi 0, %s80
      %s84 = sphi 0, %s83
      %s100 = sphi 0, %s84
      %s106 = sphi 0, %s108
      %s109 = sphi 0, %s106
      %s110 = sphi 0, %s109
      %s126 = sphi 0, %s110
    $region4: #{tpu_custom_call.1} parent=1 // loop_header_branch
      %21 = sbr.rel (%p19) target = $region8
    $region5: #{tpu_custom_call.1} parent=1 // loop_body
      %s23 = ssub.s32 %s18, 1
      %s24 = ssub.s32 %s18, 2
      %s25 = sadd.s32 %s18, 1
      %s26 = ssub.s32 %s18, %s25
      %p27 = scmp.eq.s32.totalorder %s26, 0
      %s29 = sadd.s32 %s28, 1
      %s30 = scalar_select %p27, %s28, %s29
      %p33 = pneg %p27
      %p34 = scmp.eq.s32.totalorder %s18, 3
      %p35 = por %p33, %p34
      %p36 = scmp.ne.s32.totalorder %s28, %s31
      %p37 = scmp.eq.s32.totalorder %s18, 0
      %p38 = por %p36, %p37
      %p39 = scmp.ne.s32.totalorder %s28, %s31
      %p40 = scmp.eq.s32.totalorder %s23, 3
      %p41 = por %p39, %p40
      %p42 = scmp.ne.s32.totalorder %s31, %s32
      %p43 = scmp.eq.s32.totalorder %s23, 0
      %p44 = por %p42, %p43
      %p45 = scmp.ne.s32.totalorder %s31, %s32
      %p46 = scmp.eq.s32.totalorder %s24, 3
      %p47 = por %p45, %p46
      %p49 = scmp.ne.s32.totalorder %s32, %s48
      %p50 = scmp.eq.s32.totalorder %s24, 0
      %p51 = por %p49, %p50
      %s52 = ssub.s32 %s18, %s25
      %p53 = scmp.eq.s32.totalorder %s52, 0
      %s55 = sadd.s32 %s54, 1
      %s56 = scalar_select %p53, %s54, %s55
      %p59 = pneg %p53
      %p60 = scmp.eq.s32.totalorder %s18, 3
      %p61 = por %p59, %p60
      %p62 = scmp.ne.s32.totalorder %s54, %s57
      %p63 = scmp.eq.s32.totalorder %s18, 0
      %p64 = por %p62, %p63
      %p65 = scmp.ne.s32.totalorder %s54, %s57
      %p66 = scmp.eq.s32.totalorder %s23, 3
      %p67 = por %p65, %p66
      %p68 = scmp.ne.s32.totalorder %s57, %s58
      %p69 = scmp.eq.s32.totalorder %s23, 0
      %p70 = por %p68, %p69
      %p71 = scmp.ne.s32.totalorder %s57, %s58
      %p72 = scmp.eq.s32.totalorder %s24, 3
      %p73 = por %p71, %p72
      %p75 = scmp.ne.s32.totalorder %s58, %s74
      %p76 = scmp.eq.s32.totalorder %s24, 0
      %p77 = por %p75, %p76
      %s78 = ssub.s32 %s18, %s25
      %p79 = scmp.eq.s32.totalorder %s78, 0
      %s81 = sadd.s32 %s80, 1
      %s82 = scalar_select %p79, %s80, %s81
      %p85 = pneg %p79
      %p86 = scmp.eq.s32.totalorder %s18, 3
      %p87 = por %p85, %p86
      %p88 = scmp.ne.s32.totalorder %s80, %s83
      %p89 = scmp.eq.s32.totalorder %s18, 0
      %p90 = por %p88, %p89
      %p91 = scmp.ne.s32.totalorder %s80, %s83
      %p92 = scmp.eq.s32.totalorder %s23, 3
      %p93 = por %p91, %p92
      %p94 = scmp.ne.s32.totalorder %s83, %s84
      %p95 = scmp.eq.s32.totalorder %s23, 0
      %p96 = por %p94, %p95
      %p97 = scmp.ne.s32.totalorder %s83, %s84
      %p98 = scmp.eq.s32.totalorder %s24, 3
      %p99 = por %p97, %p98
      %p101 = scmp.ne.s32.totalorder %s84, %s100
      %p102 = scmp.eq.s32.totalorder %s24, 0
      %p103 = por %p101, %p102
      %s104 = ssub.s32 %s18, %s25
      %p105 = scmp.eq.s32.totalorder %s104, 0
      %s107 = sadd.s32 %s106, 1
      %s108 = scalar_select %p105, %s106, %s107
      %p111 = pneg %p105
      %p112 = scmp.eq.s32.totalorder %s18, 3
      %p113 = por %p111, %p112
      %p114 = scmp.ne.s32.totalorder %s106, %s109
      %p115 = scmp.eq.s32.totalorder %s18, 0
      %p116 = por %p114, %p115
      %p117 = scmp.ne.s32.totalorder %s106, %s109
      %p118 = scmp.eq.s32.totalorder %s23, 3
      %p119 = por %p117, %p118
      %p120 = scmp.ne.s32.totalorder %s109, %s110
      %p121 = scmp.eq.s32.totalorder %s23, 0
      %p122 = por %p120, %p121
      %p123 = scmp.ne.s32.totalorder %s109, %s110
      %p124 = scmp.eq.s32.totalorder %s24, 3
      %p125 = por %p123, %p124
      %p127 = scmp.ne.s32.totalorder %s110, %s126
      %p128 = scmp.eq.s32.totalorder %s24, 0
      %p129 = por %p127, %p128
      %p130 = scmp.le.s32.totalorder 1, %s18
      %p131 = scmp.lt.s32.totalorder %s18, 5
      %p132 = pnand %p130, %p131
      %p133 = pneg %p132
      // Predicated region
      $region9: #{tpu_custom_call.1} parent=5 // pred_check
        _
      $region10: #{tpu_custom_call.1} parent=5 // pred_check_branch
        %135 = sbr.rel (%p132) target = $region12
      $region11: #{tpu_custom_call.1} parent=5 // pred_region
        %s136 = ssub.s32 %s18, 1
      $region12: #{tpu_custom_call.1} parent=5 // pred_fallthru
        _
      %p137 = scmp.lt.s32.totalorder %s18, 4
      // Predicated region
      $region13: #{tpu_custom_call.1} parent=5 // pred_check
        %p138 = pneg %p137
      $region14: #{tpu_custom_call.1} parent=5 // pred_check_branch
        %140 = sbr.rel (%p138) target = $region16
      $region15: #{tpu_custom_call.1} parent=5 // pred_region
        // Predicated region
        $region17: #{tpu_custom_call.1} parent=15 // pred_check
          %p141 = pneg %p38
        $region18: #{tpu_custom_call.1} parent=15 // pred_check_branch
          %143 = sbr.rel (%p141) target = $region20
        $region19: #{tpu_custom_call.1} parent=15 // pred_region
          %s144 = sand.u32 %s28, 1
          %s145 = scalar_lea.sflag [#allocation3], %s144
          %s146 = sand.u32 %s28, 1
          %s147 = smul.addr %s146, 256
          %s148 = scalar_lea.vmem [#allocation2], %s147
          %s149 = smul.u32 2, %s18
          %s151 = ssub.s32 4096, 4096
          %152 = vsyncadd %s145, %s151
          %s153 = smul.addr %s149, 16
          %s154 = smul.addr %s153, 128
          %s155 = scalar_lea.hbm %s0, %s154
          %s156 = sshll.u32 %s148, 4
          %s157 = int_to_ptr.vmem [resolvable:$true] %s156
          %162 = dma.hbm_to_vmem [thread:$0]  %s155, 4096, %s157, %s145, 128, 128, 8
        $region20: #{tpu_custom_call.1} parent=15 // pred_fallthru
          _
        // Predicated region
        $region21: #{tpu_custom_call.1} parent=15 // pred_check
          %p163 = pneg %p64
        $region22: #{tpu_custom_call.1} parent=15 // pred_check_branch
          %165 = sbr.rel (%p163) target = $region24
        $region23: #{tpu_custom_call.1} parent=15 // pred_region
          %s166 = sand.u32 %s18, 1
          %s167 = scalar_lea.sflag [#allocation6], %s166
          %s168 = sand.u32 %s54, 1
          %s169 = smul.addr %s168, 256
          %s170 = scalar_lea.vmem [#allocation5], %s169
          %s171 = smul.u32 2, %s18
          %s173 = ssub.s32 4096, 4096
          %174 = vsyncadd %s167, %s173
          %s175 = smul.addr %s171, 16
          %s176 = smul.addr %s175, 128
          %s177 = scalar_lea.hbm %s1, %s176
          %s178 = sshll.u32 %s170, 4
          %s179 = int_to_ptr.vmem [resolvable:$true] %s178
          %184 = dma.hbm_to_vmem [thread:$0]  %s177, 4096, %s179, %s167, 128, 128, 8
        $region24: #{tpu_custom_call.1} parent=15 // pred_fallthru
          _
        // Predicated region
        $region25: #{tpu_custom_call.1} parent=15 // pred_check
          %p185 = pneg %p90
        $region26: #{tpu_custom_call.1} parent=15 // pred_check_branch
          %187 = sbr.rel (%p185) target = $region28
        $region27: #{tpu_custom_call.1} parent=15 // pred_region
          %s188 = sand.u32 %s18, 1
          %s189 = scalar_lea.sflag [#allocation6], %s188
          %s190 = sand.u32 %s80, 1
          %s191 = smul.addr %s190, 128
          %s192 = scalar_lea.vmem [#allocation7], %s191
          %s193 = smul.u32 2, %s18
          %s195 = ssub.s32 2048, 2048
          %196 = vsyncadd %s189, %s195
          %s197 = smul.addr %s193, 16
          %s198 = smul.addr %s197, 64
          %s199 = scalar_lea.hbm %s2, %s198
          %s200 = sshll.u32 %s192, 4
          %s201 = int_to_ptr.vmem [resolvable:$true] %s200
          %206 = dma.hbm_to_vmem [thread:$0]  %s199, 2048, %s201, %s189, 64, 64, 4
        $region28: #{tpu_custom_call.1} parent=15 // pred_fallthru
          _
      $region16: #{tpu_custom_call.1} parent=5 // pred_fallthru
        _
      %p207 = scmp.le.s32.totalorder 1, %s18
      %p208 = scmp.lt.s32.totalorder %s18, 5
      %p209 = pnand %p207, %p208
      %p210 = pneg %p209
      // Predicated region
      $region29: #{tpu_custom_call.1} parent=5 // pred_check
        _
      $region30: #{tpu_custom_call.1} parent=5 // pred_check_branch
        %212 = sbr.rel (%p209) target = $region32
      $region31: #{tpu_custom_call.1} parent=5 // pred_region
        %s213 = ssub.s32 %s18, 1
        %s214 = sand.u32 %s31, 1
        %s215 = scalar_lea.sflag [#allocation3], %s214
        %s216 = sand.u32 %s31, 1
        %s217 = smul.addr %s216, 256
        %s218 = scalar_lea.vmem [#allocation2], %s217
        // Predicated region
        $region33: #{tpu_custom_call.1} parent=31 // pred_check
          %p219 = pneg %p44
        $region34: #{tpu_custom_call.1} parent=31 // pred_check_branch
          %221 = sbr.rel (%p219) target = $region36
        $region35: #{tpu_custom_call.1} parent=31 // pred_region
          %222 = dma.done %s215, 4096
        $region36: #{tpu_custom_call.1} parent=31 // pred_fallthru
          _
        %s223 = sand.u32 %s23, 1
        %s224 = scalar_lea.sflag [#allocation6], %s223
        %s225 = sand.u32 %s57, 1
        %s226 = smul.addr %s225, 256
        %s227 = scalar_lea.vmem [#allocation5], %s226
        // Predicated region
        $region37: #{tpu_custom_call.1} parent=31 // pred_check
          %p228 = pneg %p70
        $region38: #{tpu_custom_call.1} parent=31 // pred_check_branch
          %230 = sbr.rel (%p228) target = $region40
        $region39: #{tpu_custom_call.1} parent=31 // pred_region
          %231 = dma.done %s224, 4096
        $region40: #{tpu_custom_call.1} parent=31 // pred_fallthru
          _
        %s232 = sand.u32 %s23, 1
        %s233 = scalar_lea.sflag [#allocation6], %s232
        %s234 = sand.u32 %s83, 1
        %s235 = smul.addr %s234, 128
        %s236 = scalar_lea.vmem [#allocation7], %s235
        // Predicated region
        $region41: #{tpu_custom_call.1} parent=31 // pred_check
          %p237 = pneg %p96
        $region42: #{tpu_custom_call.1} parent=31 // pred_check_branch
          %239 = sbr.rel (%p237) target = $region44
        $region43: #{tpu_custom_call.1} parent=31 // pred_region
          %240 = dma.done %s233, 2048
        $region44: #{tpu_custom_call.1} parent=31 // pred_fallthru
          _
        %s241 = sand.u32 %s31, 1
        %s242 = scalar_lea.sflag [#allocation3], %s241
        %s243 = sand.u32 %s31, 1
        %s244 = smul.addr %s243, 256
        %s245 = scalar_lea.vmem [#allocation2], %s244
        %p246 = pneg %p44
        %p247 = pneg %p41
        %s248 = sand.u32 %s23, 1
        %s249 = scalar_lea.sflag [#allocation6], %s248
        %s250 = sand.u32 %s57, 1
        %s251 = smul.addr %s250, 256
        %s252 = scalar_lea.vmem [#allocation5], %s251
        %p253 = pneg %p70
        %p254 = pneg %p67
        %s255 = sand.u32 %s23, 1
        %s256 = scalar_lea.sflag [#allocation6], %s255
        %s257 = sand.u32 %s83, 1
        %s258 = smul.addr %s257, 128
        %s259 = scalar_lea.vmem [#allocation7], %s258
        %p260 = pneg %p96
        %p261 = pneg %p93
        %p262 = pneg %p122
        %p263 = pneg %p119
        %s264 = sand.u32 %s109, 1
        %s265 = scalar_lea.sflag [#allocation4], %s264
        %s266 = sand.u32 %s109, 1
        %s267 = smul.addr %s266, 256
        %s268 = scalar_lea.vmem [#allocation8], %s267
        %s269 = smul.u32 2, %s23
        %s270 = smul.u32 2, %s23
        %s271 = smul.u32 2, %s23
        %s272 = smul.u32 2, %s23
        %v274 = vld [vmem:[%s218] sm:$0xff]
        %v275 = vld [vmem:[%s218 + $0x8] sm:$0xff]
        %v276 = vld [vmem:[%s218 + $0x10] sm:$0xff]
        %v277 = vld [vmem:[%s218 + $0x18] sm:$0xff]
        %v278 = vld [vmem:[%s218 + $0x20] sm:$0xff]
        %v279 = vld [vmem:[%s218 + $0x28] sm:$0xff]
        %v280 = vld [vmem:[%s218 + $0x30] sm:$0xff]
        %v281 = vld [vmem:[%s218 + $0x38] sm:$0xff]
        %v282 = vld [vmem:[%s218 + $0x40] sm:$0xff]
        %v283 = vld [vmem:[%s218 + $0x48] sm:$0xff]
        %v284 = vld [vmem:[%s218 + $0x50] sm:$0xff]
        %v285 = vld [vmem:[%s218 + $0x58] sm:$0xff]
        %v286 = vld [vmem:[%s218 + $0x60] sm:$0xff]
        %v287 = vld [vmem:[%s218 + $0x68] sm:$0xff]
        %v288 = vld [vmem:[%s218 + $0x70] sm:$0xff]
        %v289 = vld [vmem:[%s218 + $0x78] sm:$0xff]
        %v290 = vld [vmem:[%s218 + $0x80] sm:$0xff]
        %v291 = vld [vmem:[%s218 + $0x88] sm:$0xff]
        %v292 = vld [vmem:[%s218 + $0x90] sm:$0xff]
        %v293 = vld [vmem:[%s218 + $0x98] sm:$0xff]
        %v294 = vld [vmem:[%s218 + $0xa0] sm:$0xff]
        %v295 = vld [vmem:[%s218 + $0xa8] sm:$0xff]
        %v296 = vld [vmem:[%s218 + $0xb0] sm:$0xff]
        %v297 = vld [vmem:[%s218 + $0xb8] sm:$0xff]
        %v298 = vld [vmem:[%s218 + $0xc0] sm:$0xff]
        %v299 = vld [vmem:[%s218 + $0xc8] sm:$0xff]
        %v300 = vld [vmem:[%s218 + $0xd0] sm:$0xff]
        %v301 = vld [vmem:[%s218 + $0xd8] sm:$0xff]
        %v302 = vld [vmem:[%s218 + $0xe0] sm:$0xff]
        %v303 = vld [vmem:[%s218 + $0xe8] sm:$0xff]
        %v304 = vld [vmem:[%s218 + $0xf0] sm:$0xff]
        %v305 = vld [vmem:[%s218 + $0xf8] sm:$0xff]
        %v306 = vpack.c.bf16 %v275, %v274
        %v307 = vpack.c.bf16 %v277, %v276
        %v308 = vpack.c.bf16 %v279, %v278
        %v309 = vpack.c.bf16 %v281, %v280
        %v310 = vpack.c.bf16 %v283, %v282
        %v311 = vpack.c.bf16 %v285, %v284
        %v312 = vpack.c.bf16 %v287, %v286
        %v313 = vpack.c.bf16 %v289, %v288
        %v314 = vpack.c.bf16 %v291, %v290
        %v315 = vpack.c.bf16 %v293, %v292
        %v316 = vpack.c.bf16 %v295, %v294
        %v317 = vpack.c.bf16 %v297, %v296
        %v318 = vpack.c.bf16 %v299, %v298
        %v319 = vpack.c.bf16 %v301, %v300
        %v320 = vpack.c.bf16 %v303, %v302
        %v321 = vpack.c.bf16 %v305, %v304
        %v322 = vld [vmem:[%s227] sm:$0xff]
        %v323 = vld [vmem:[%s227 + $0x8] sm:$0xff]
        %v324 = vld [vmem:[%s227 + $0x10] sm:$0xff]
        %v325 = vld [vmem:[%s227 + $0x18] sm:$0xff]
        %v326 = vld [vmem:[%s227 + $0x20] sm:$0xff]
        %v327 = vld [vmem:[%s227 + $0x28] sm:$0xff]
        %v328 = vld [vmem:[%s227 + $0x30] sm:$0xff]
        %v329 = vld [vmem:[%s227 + $0x38] sm:$0xff]
        %v330 = vld [vmem:[%s227 + $0x40] sm:$0xff]
        %v331 = vld [vmem:[%s227 + $0x48] sm:$0xff]
        %v332 = vld [vmem:[%s227 + $0x50] sm:$0xff]
        %v333 = vld [vmem:[%s227 + $0x58] sm:$0xff]
        %v334 = vld [vmem:[%s227 + $0x60] sm:$0xff]
        %v335 = vld [vmem:[%s227 + $0x68] sm:$0xff]
        %v336 = vld [vmem:[%s227 + $0x70] sm:$0xff]
        %v337 = vld [vmem:[%s227 + $0x78] sm:$0xff]
        %v338 = vld [vmem:[%s227 + $0x80] sm:$0xff]
        %v339 = vld [vmem:[%s227 + $0x88] sm:$0xff]
        %v340 = vld [vmem:[%s227 + $0x90] sm:$0xff]
        %v341 = vld [vmem:[%s227 + $0x98] sm:$0xff]
        %v342 = vld [vmem:[%s227 + $0xa0] sm:$0xff]
        %v343 = vld [vmem:[%s227 + $0xa8] sm:$0xff]
        %v344 = vld [vmem:[%s227 + $0xb0] sm:$0xff]
        %v345 = vld [vmem:[%s227 + $0xb8] sm:$0xff]
        %v346 = vld [vmem:[%s227 + $0xc0] sm:$0xff]
        %v347 = vld [vmem:[%s227 + $0xc8] sm:$0xff]
        %v348 = vld [vmem:[%s227 + $0xd0] sm:$0xff]
        %v349 = vld [vmem:[%s227 + $0xd8] sm:$0xff]
        %v350 = vld [vmem:[%s227 + $0xe0] sm:$0xff]
        %v351 = vld [vmem:[%s227 + $0xe8] sm:$0xff]
        %v352 = vld [vmem:[%s227 + $0xf0] sm:$0xff]
        %v353 = vld [vmem:[%s227 + $0xf8] sm:$0xff]
        %v354 = vpack.c.bf16 %v323, %v322
        %v355 = vpack.c.bf16 %v325, %v324
        %v356 = vpack.c.bf16 %v327, %v326
        %v357 = vpack.c.bf16 %v329, %v328
        %v358 = vpack.c.bf16 %v331, %v330
        %v359 = vpack.c.bf16 %v333, %v332
        %v360 = vpack.c.bf16 %v335, %v334
        %v361 = vpack.c.bf16 %v337, %v336
        %v362 = vpack.c.bf16 %v339, %v338
        %v363 = vpack.c.bf16 %v341, %v340
        %v364 = vpack.c.bf16 %v343, %v342
        %v365 = vpack.c.bf16 %v345, %v344
        %v366 = vpack.c.bf16 %v347, %v346
        %v367 = vpack.c.bf16 %v349, %v348
        %v368 = vpack.c.bf16 %v351, %v350
        %v369 = vpack.c.bf16 %v353, %v352
        %370 = vmatprep.subr.bf16.mxu0 0
        %371 = vmatpush1.bf16.msra.mxu0 %v361
        %372 = vmatprep.subr.bf16.mxu0 0
        %373 = vmatpush1.bf16.msra.mxu0 %v360
        %374 = vmatprep.subr.bf16.mxu0 0
        %375 = vmatpush1.bf16.msra.mxu0 %v359
        %376 = vmatprep.subr.bf16.mxu0 0
        %377 = vmatpush1.bf16.msra.mxu0 %v358
        %378 = vmatprep.subr.bf16.mxu0 0
        %379 = vmatpush1.bf16.msra.mxu0 %v357
        %380 = vmatprep.subr.bf16.mxu0 0
        %381 = vmatpush1.bf16.msra.mxu0 %v356
        %382 = vmatprep.subr.bf16.mxu0 0
        %383 = vmatpush1.bf16.msra.mxu0 %v355
        %384 = vmatprep.subr.bf16.mxu0 0
        %385 = vmatpush1.bf16.msra.mxu0 %v354
        %386 = vmatprep.subr.bf16.mxu0 0
        %387 = vmatpush2.bf16.msra.mxu0 0
        %388 = vmatprep.subr.bf16.mxu0 0
        %389 = vmatpush2.bf16.msra.mxu0 0
        %390 = vmatprep.subr.bf16.mxu0 0
        %391 = vmatpush2.bf16.msra.mxu0 0
        %392 = vmatprep.subr.bf16.mxu0 0
        %393 = vmatpush2.bf16.msra.mxu0 0
        %394 = vmatprep.subr.bf16.mxu0 0
        %395 = vmatpush2.bf16.msra.mxu0 0
        %396 = vmatprep.subr.bf16.mxu0 0
        %397 = vmatpush2.bf16.msra.mxu0 0
        %398 = vmatprep.subr.bf16.mxu0 0
        %399 = vmatpush2.bf16.msra.mxu0 0
        %400 = vmatprep.subr.bf16.mxu0 0
        %401 = vmatpush2.bf16.msra.mxu0 0
        %402 = vmatprep.mubr.bf16.mxu0 0
        %403 = vmatmul.mubr.bf16.gmra.mxu0 %v306
        %v404 = vpop.f32.mrf.mxu0
        %v405 = vadd.f32 0.0, %v404
        %v406 = vpop.f32.mrf.mxu0
        %v407 = vpop.f32.mrf.mxu0
        %v408 = vadd.f32 0.0, %v407
        %v409 = vpop.f32.mrf.mxu0
        %410 = vmatprep.mubr.bf16.mxu0 0
        %411 = vmatmul.mubr.bf16.gmra.mxu0 %v307
        %v412 = vpop.f32.mrf.mxu0
        %v413 = vadd.f32 0.0, %v412
        %v414 = vpop.f32.mrf.mxu0
        %v415 = vpop.f32.mrf.mxu0
        %v416 = vadd.f32 0.0, %v415
        %v417 = vpop.f32.mrf.mxu0
        %418 = vmatprep.mubr.bf16.mxu0 0
        %419 = vmatmul.mubr.bf16.gmra.mxu0 %v308
        %v420 = vpop.f32.mrf.mxu0
        %v421 = vadd.f32 0.0, %v420
        %v422 = vpop.f32.mrf.mxu0
        %v423 = vpop.f32.mrf.mxu0
        %v424 = vadd.f32 0.0, %v423
        %v425 = vpop.f32.mrf.mxu0
        %426 = vmatprep.mubr.bf16.mxu0 0
        %427 = vmatmul.mubr.bf16.gmra.mxu0 %v309
        %v428 = vpop.f32.mrf.mxu0
        %v429 = vadd.f32 0.0, %v428
        %v430 = vpop.f32.mrf.mxu0
        %v431 = vpop.f32.mrf.mxu0
        %v432 = vadd.f32 0.0, %v431
        %v433 = vpop.f32.mrf.mxu0
        %434 = vmatprep.mubr.bf16.mxu0 0
        %435 = vmatmul.mubr.bf16.gmra.mxu0 %v310
        %v436 = vpop.f32.mrf.mxu0
        %v437 = vadd.f32 0.0, %v436
        %v438 = vpop.f32.mrf.mxu0
        %v439 = vpop.f32.mrf.mxu0
        %v440 = vadd.f32 0.0, %v439
        %v441 = vpop.f32.mrf.mxu0
        %442 = vmatprep.mubr.bf16.mxu0 0
        %443 = vmatmul.mubr.bf16.gmra.mxu0 %v311
        %v444 = vpop.f32.mrf.mxu0
        %v445 = vadd.f32 0.0, %v444
        %v446 = vpop.f32.mrf.mxu0
        %v447 = vpop.f32.mrf.mxu0
        %v448 = vadd.f32 0.0, %v447
        %v449 = vpop.f32.mrf.mxu0
        %450 = vmatprep.mubr.bf16.mxu0 0
        %451 = vmatmul.mubr.bf16.gmra.mxu0 %v312
        %v452 = vpop.f32.mrf.mxu0
        %v453 = vadd.f32 0.0, %v452
        %v454 = vpop.f32.mrf.mxu0
        %v455 = vpop.f32.mrf.mxu0
        %v456 = vadd.f32 0.0, %v455
        %v457 = vpop.f32.mrf.mxu0
        %458 = vmatprep.mubr.bf16.mxu0 0
        %459 = vmatmul.mubr.bf16.gmra.mxu0 %v313
        %v460 = vpop.f32.mrf.mxu0
        %v461 = vadd.f32 0.0, %v460
        %v462 = vpop.f32.mrf.mxu0
        %v463 = vpop.f32.mrf.mxu0
        %v464 = vadd.f32 0.0, %v463
        %v465 = vpop.f32.mrf.mxu0
        %466 = vdwg.mxu0
        %467 = vmatprep.subr.bf16.mxu0 0
        %468 = vmatpush1.bf16.msra.mxu0 %v369
        %469 = vmatprep.subr.bf16.mxu0 0
        %470 = vmatpush1.bf16.msra.mxu0 %v368
        %471 = vmatprep.subr.bf16.mxu0 0
        %472 = vmatpush1.bf16.msra.mxu0 %v367
        %473 = vmatprep.subr.bf16.mxu0 0
        %474 = vmatpush1.bf16.msra.mxu0 %v366
        %475 = vmatprep.subr.bf16.mxu0 0
        %476 = vmatpush1.bf16.msra.mxu0 %v365
        %477 = vmatprep.subr.bf16.mxu0 0
        %478 = vmatpush1.bf16.msra.mxu0 %v364
        %479 = vmatprep.subr.bf16.mxu0 0
        %480 = vmatpush1.bf16.msra.mxu0 %v363
        %481 = vmatprep.subr.bf16.mxu0 0
        %482 = vmatpush1.bf16.msra.mxu0 %v362
        %483 = vmatprep.subr.bf16.mxu0 0
        %484 = vmatpush2.bf16.msra.mxu0 0
        %485 = vmatprep.subr.bf16.mxu0 0
        %486 = vmatpush2.bf16.msra.mxu0 0
        %487 = vmatprep.subr.bf16.mxu0 0
        %488 = vmatpush2.bf16.msra.mxu0 0
        %489 = vmatprep.subr.bf16.mxu0 0
        %490 = vmatpush2.bf16.msra.mxu0 0
        %491 = vmatprep.subr.bf16.mxu0 0
        %492 = vmatpush2.bf16.msra.mxu0 0
        %493 = vmatprep.subr.bf16.mxu0 0
        %494 = vmatpush2.bf16.msra.mxu0 0
        %495 = vmatprep.subr.bf16.mxu0 0
        %496 = vmatpush2.bf16.msra.mxu0 0
        %497 = vmatprep.subr.bf16.mxu0 0
        %498 = vmatpush2.bf16.msra.mxu0 0
        %499 = vmatprep.mubr.bf16.mxu0 0
        %500 = vmatmul.mubr.bf16.gmra.mxu0 %v314
        %v501 = vpop.f32.mrf.mxu0
        %v502 = vadd.f32 0.0, %v501
        %v503 = vpop.f32.mrf.mxu0
        %v504 = vpop.f32.mrf.mxu0
        %v505 = vadd.f32 0.0, %v504
        %v506 = vpop.f32.mrf.mxu0
        %507 = vmatprep.mubr.bf16.mxu0 0
        %508 = vmatmul.mubr.bf16.gmra.mxu0 %v315
        %v509 = vpop.f32.mrf.mxu0
        %v510 = vadd.f32 0.0, %v509
        %v511 = vpop.f32.mrf.mxu0
        %v512 = vpop.f32.mrf.mxu0
        %v513 = vadd.f32 0.0, %v512
        %v514 = vpop.f32.mrf.mxu0
        %515 = vmatprep.mubr.bf16.mxu0 0
        %516 = vmatmul.mubr.bf16.gmra.mxu0 %v316
        %v517 = vpop.f32.mrf.mxu0
        %v518 = vadd.f32 0.0, %v517
        %v519 = vpop.f32.mrf.mxu0
        %v520 = vpop.f32.mrf.mxu0
        %v521 = vadd.f32 0.0, %v520
        %v522 = vpop.f32.mrf.mxu0
        %523 = vmatprep.mubr.bf16.mxu0 0
        %524 = vmatmul.mubr.bf16.gmra.mxu0 %v317
        %v525 = vpop.f32.mrf.mxu0
        %v526 = vadd.f32 0.0, %v525
        %v527 = vpop.f32.mrf.mxu0
        %v528 = vpop.f32.mrf.mxu0
        %v529 = vadd.f32 0.0, %v528
        %v530 = vpop.f32.mrf.mxu0
        %531 = vmatprep.mubr.bf16.mxu0 0
        %532 = vmatmul.mubr.bf16.gmra.mxu0 %v318
        %v533 = vpop.f32.mrf.mxu0
        %v534 = vadd.f32 0.0, %v533
        %v535 = vpop.f32.mrf.mxu0
        %v536 = vpop.f32.mrf.mxu0
        %v537 = vadd.f32 0.0, %v536
        %v538 = vpop.f32.mrf.mxu0
        %539 = vmatprep.mubr.bf16.mxu0 0
        %540 = vmatmul.mubr.bf16.gmra.mxu0 %v319
        %v541 = vpop.f32.mrf.mxu0
        %v542 = vadd.f32 0.0, %v541
        %v543 = vpop.f32.mrf.mxu0
        %v544 = vpop.f32.mrf.mxu0
        %v545 = vadd.f32 0.0, %v544
        %v546 = vpop.f32.mrf.mxu0
        %547 = vmatprep.mubr.bf16.mxu0 0
        %548 = vmatmul.mubr.bf16.gmra.mxu0 %v320
        %v549 = vpop.f32.mrf.mxu0
        %v550 = vadd.f32 0.0, %v549
        %v551 = vpop.f32.mrf.mxu0
        %v552 = vpop.f32.mrf.mxu0
        %v553 = vadd.f32 0.0, %v552
        %v554 = vpop.f32.mrf.mxu0
        %555 = vmatprep.mubr.bf16.mxu0 0
        %556 = vmatmul.mubr.bf16.gmra.mxu0 %v321
        %v557 = vpop.f32.mrf.mxu0
        %v558 = vadd.f32 0.0, %v557
        %v559 = vpop.f32.mrf.mxu0
        %v560 = vpop.f32.mrf.mxu0
        %v561 = vadd.f32 0.0, %v560
        %v562 = vpop.f32.mrf.mxu0
        %563 = vdwg.mxu0
        %v564 = vld [vmem:[%s236] sm:$0xf]
        %v565 = vld [vmem:[%s236 + $0x4] sm:$0xf]
        %v566 = vld [vmem:[%s236 + $0x8] sm:$0xf]
        %v567 = vld [vmem:[%s236 + $0xc] sm:$0xf]
        %v568 = vld [vmem:[%s236 + $0x10] sm:$0xf]
        %v569 = vld [vmem:[%s236 + $0x14] sm:$0xf]
        %v570 = vld [vmem:[%s236 + $0x18] sm:$0xf]
        %v571 = vld [vmem:[%s236 + $0x1c] sm:$0xf]
        %v572 = vld [vmem:[%s236 + $0x20] sm:$0xf]
        %v573 = vld [vmem:[%s236 + $0x24] sm:$0xf]
        %v574 = vld [vmem:[%s236 + $0x28] sm:$0xf]
        %v575 = vld [vmem:[%s236 + $0x2c] sm:$0xf]
        %v576 = vld [vmem:[%s236 + $0x30] sm:$0xf]
        %v577 = vld [vmem:[%s236 + $0x34] sm:$0xf]
        %v578 = vld [vmem:[%s236 + $0x38] sm:$0xf]
        %v579 = vld [vmem:[%s236 + $0x3c] sm:$0xf]
        %v580 = vld [vmem:[%s236 + $0x40] sm:$0xf]
        %v581 = vld [vmem:[%s236 + $0x44] sm:$0xf]
        %v582 = vld [vmem:[%s236 + $0x48] sm:$0xf]
        %v583 = vld [vmem:[%s236 + $0x4c] sm:$0xf]
        %v584 = vld [vmem:[%s236 + $0x50] sm:$0xf]
        %v585 = vld [vmem:[%s236 + $0x54] sm:$0xf]
        %v586 = vld [vmem:[%s236 + $0x58] sm:$0xf]
        %v587 = vld [vmem:[%s236 + $0x5c] sm:$0xf]
        %v588 = vld [vmem:[%s236 + $0x60] sm:$0xf]
        %v589 = vld [vmem:[%s236 + $0x64] sm:$0xf]
        %v590 = vld [vmem:[%s236 + $0x68] sm:$0xf]
        %v591 = vld [vmem:[%s236 + $0x6c] sm:$0xf]
        %v592 = vld [vmem:[%s236 + $0x70] sm:$0xf]
        %v593 = vld [vmem:[%s236 + $0x74] sm:$0xf]
        %v594 = vld [vmem:[%s236 + $0x78] sm:$0xf]
        %v595 = vld [vmem:[%s236 + $0x7c] sm:$0xf]
        %v596 = vunpack.c.l.bf16 %v564
        %v597 = vunpack.c.l.bf16 %v565
        %v598 = vunpack.c.l.bf16 %v566
        %v599 = vunpack.c.l.bf16 %v567
        %v600 = vunpack.c.l.bf16 %v568
        %v601 = vunpack.c.l.bf16 %v569
        %v602 = vunpack.c.l.bf16 %v570
        %v603 = vunpack.c.l.bf16 %v571
        %v604 = vunpack.c.l.bf16 %v572
        %v605 = vunpack.c.l.bf16 %v573
        %v606 = vunpack.c.l.bf16 %v574
        %v607 = vunpack.c.l.bf16 %v575
        %v608 = vunpack.c.l.bf16 %v576
        %v609 = vunpack.c.l.bf16 %v577
        %v610 = vunpack.c.l.bf16 %v578
        %v611 = vunpack.c.l.bf16 %v579
        %v612 = vunpack.c.l.bf16 %v580
        %v613 = vunpack.c.l.bf16 %v581
        %v614 = vunpack.c.l.bf16 %v582
        %v615 = vunpack.c.l.bf16 %v583
        %v616 = vunpack.c.l.bf16 %v584
        %v617 = vunpack.c.l.bf16 %v585
        %v618 = vunpack.c.l.bf16 %v586
        %v619 = vunpack.c.l.bf16 %v587
        %v620 = vunpack.c.l.bf16 %v588
        %v621 = vunpack.c.l.bf16 %v589
        %v622 = vunpack.c.l.bf16 %v590
        %v623 = vunpack.c.l.bf16 %v591
        %v624 = vunpack.c.l.bf16 %v592
        %v625 = vunpack.c.l.bf16 %v593
        %v626 = vunpack.c.l.bf16 %v594
        %v627 = vunpack.c.l.bf16 %v595
        %v628 = vmul.f32 %v405, %v596
        %v629 = vmul.f32 %v408, %v597
        %v630 = vmul.f32 %v413, %v598
        %v631 = vmul.f32 %v416, %v599
        %v632 = vmul.f32 %v421, %v600
        %v633 = vmul.f32 %v424, %v601
        %v634 = vmul.f32 %v429, %v602
        %v635 = vmul.f32 %v432, %v603
        %v636 = vmul.f32 %v437, %v604
        %v637 = vmul.f32 %v440, %v605
        %v638 = vmul.f32 %v445, %v606
        %v639 = vmul.f32 %v448, %v607
        %v640 = vmul.f32 %v453, %v608
        %v641 = vmul.f32 %v456, %v609
        %v642 = vmul.f32 %v461, %v610
        %v643 = vmul.f32 %v464, %v611
        %v644 = vmul.f32 %v502, %v612
        %v645 = vmul.f32 %v505, %v613
        %v646 = vmul.f32 %v510, %v614
        %v647 = vmul.f32 %v513, %v615
        %v648 = vmul.f32 %v518, %v616
        %v649 = vmul.f32 %v521, %v617
        %v650 = vmul.f32 %v526, %v618
        %v651 = vmul.f32 %v529, %v619
        %v652 = vmul.f32 %v534, %v620
        %v653 = vmul.f32 %v537, %v621
        %v654 = vmul.f32 %v542, %v622
        %v655 = vmul.f32 %v545, %v623
        %v656 = vmul.f32 %v550, %v624
        %v657 = vmul.f32 %v553, %v625
        %v658 = vmul.f32 %v558, %v626
        %v659 = vmul.f32 %v561, %v627
        %v660 = vpack.c.bf16 %v408, %v405
        %v661 = vpack.c.bf16 %v416, %v413
        %v662 = vpack.c.bf16 %v424, %v421
        %v663 = vpack.c.bf16 %v432, %v429
        %v664 = vpack.c.bf16 %v440, %v437
        %v665 = vpack.c.bf16 %v448, %v445
        %v666 = vpack.c.bf16 %v456, %v453
        %v667 = vpack.c.bf16 %v464, %v461
        %v668 = vpack.c.bf16 %v505, %v502
        %v669 = vpack.c.bf16 %v513, %v510
        %v670 = vpack.c.bf16 %v521, %v518
        %v671 = vpack.c.bf16 %v529, %v526
        %v672 = vpack.c.bf16 %v537, %v534
        %v673 = vpack.c.bf16 %v545, %v542
        %v674 = vpack.c.bf16 %v553, %v550
        %v675 = vpack.c.bf16 %v561, %v558
        %676 = vmax.xlane.f32.xlu0 %v628
        %v677 = vpop.xlane.xlu0 %676
        %678 = vmax.xlane.f32.xlu0 %v629
        %v679 = vpop.xlane.xlu0 %678
        %680 = vmax.xlane.f32.xlu0 %v630
        %v681 = vpop.xlane.xlu0 %680
        %682 = vmax.xlane.f32.xlu0 %v631
        %v683 = vpop.xlane.xlu0 %682
        %684 = vmax.xlane.f32.xlu0 %v632
        %v685 = vpop.xlane.xlu0 %684
        %686 = vmax.xlane.f32.xlu0 %v633
        %v687 = vpop.xlane.xlu0 %686
        %688 = vmax.xlane.f32.xlu0 %v634
        %v689 = vpop.xlane.xlu0 %688
        %690 = vmax.xlane.f32.xlu0 %v635
        %v691 = vpop.xlane.xlu0 %690
        %692 = vmax.xlane.f32.xlu0 %v636
        %v693 = vpop.xlane.xlu0 %692
        %694 = vmax.xlane.f32.xlu0 %v637
        %v695 = vpop.xlane.xlu0 %694
        %696 = vmax.xlane.f32.xlu0 %v638
        %v697 = vpop.xlane.xlu0 %696
        %698 = vmax.xlane.f32.xlu0 %v639
        %v699 = vpop.xlane.xlu0 %698
        %700 = vmax.xlane.f32.xlu0 %v640
        %v701 = vpop.xlane.xlu0 %700
        %702 = vmax.xlane.f32.xlu0 %v641
        %v703 = vpop.xlane.xlu0 %702
        %704 = vmax.xlane.f32.xlu0 %v642
        %v705 = vpop.xlane.xlu0 %704
        %706 = vmax.xlane.f32.xlu0 %v643
        %v707 = vpop.xlane.xlu0 %706
        %708 = vmax.xlane.f32.xlu0 %v644
        %v709 = vpop.xlane.xlu0 %708
        %710 = vmax.xlane.f32.xlu0 %v645
        %v711 = vpop.xlane.xlu0 %710
        %712 = vmax.xlane.f32.xlu0 %v646
        %v713 = vpop.xlane.xlu0 %712
        %714 = vmax.xlane.f32.xlu0 %v647
        %v715 = vpop.xlane.xlu0 %714
        %716 = vmax.xlane.f32.xlu0 %v648
        %v717 = vpop.xlane.xlu0 %716
        %718 = vmax.xlane.f32.xlu0 %v649
        %v719 = vpop.xlane.xlu0 %718
        %720 = vmax.xlane.f32.xlu0 %v650
        %v721 = vpop.xlane.xlu0 %720
        %722 = vmax.xlane.f32.xlu0 %v651
        %v723 = vpop.xlane.xlu0 %722
        %724 = vmax.xlane.f32.xlu0 %v652
        %v725 = vpop.xlane.xlu0 %724
        %726 = vmax.xlane.f32.xlu0 %v653
        %v727 = vpop.xlane.xlu0 %726
        %728 = vmax.xlane.f32.xlu0 %v654
        %v729 = vpop.xlane.xlu0 %728
        %730 = vmax.xlane.f32.xlu0 %v655
        %v731 = vpop.xlane.xlu0 %730
        %732 = vmax.xlane.f32.xlu0 %v656
        %v733 = vpop.xlane.xlu0 %732
        %734 = vmax.xlane.f32.xlu0 %v657
        %v735 = vpop.xlane.xlu0 %734
        %736 = vmax.xlane.f32.xlu0 %v658
        %v737 = vpop.xlane.xlu0 %736
        %738 = vmax.xlane.f32.xlu0 %v659
        %v739 = vpop.xlane.xlu0 %738
        %v740 = vsub.f32 %v628, %v677
        %v741 = vsub.f32 %v629, %v679
        %v742 = vsub.f32 %v630, %v681
        %v743 = vsub.f32 %v631, %v683
        %v744 = vsub.f32 %v632, %v685
        %v745 = vsub.f32 %v633, %v687
        %v746 = vsub.f32 %v634, %v689
        %v747 = vsub.f32 %v635, %v691
        %v748 = vsub.f32 %v636, %v693
        %v749 = vsub.f32 %v637, %v695
        %v750 = vsub.f32 %v638, %v697
        %v751 = vsub.f32 %v639, %v699
        %v752 = vsub.f32 %v640, %v701
        %v753 = vsub.f32 %v641, %v703
        %v754 = vsub.f32 %v642, %v705
        %v755 = vsub.f32 %v643, %v707
        %v756 = vsub.f32 %v644, %v709
        %v757 = vsub.f32 %v645, %v711
        %v758 = vsub.f32 %v646, %v713
        %v759 = vsub.f32 %v647, %v715
        %v760 = vsub.f32 %v648, %v717
        %v761 = vsub.f32 %v649, %v719
        %v762 = vsub.f32 %v650, %v721
        %v763 = vsub.f32 %v651, %v723
        %v764 = vsub.f32 %v652, %v725
        %v765 = vsub.f32 %v653, %v727
        %v766 = vsub.f32 %v654, %v729
        %v767 = vsub.f32 %v655, %v731
        %v768 = vsub.f32 %v656, %v733
        %v769 = vsub.f32 %v657, %v735
        %v770 = vsub.f32 %v658, %v737
        %v771 = vsub.f32 %v659, %v739
        %v772 = vmul.f32 %v740, 1.442695
        %v773 = vpow.pop %v772
        %v774 = vmul.f32 %v741, 1.442695
        %v775 = vpow.pop %v774
        %v776 = vmul.f32 %v742, 1.442695
        %v777 = vpow.pop %v776
        %v778 = vmul.f32 %v743, 1.442695
        %v779 = vpow.pop %v778
        %v780 = vmul.f32 %v744, 1.442695
        %v781 = vpow.pop %v780
        %v782 = vmul.f32 %v745, 1.442695
        %v783 = vpow.pop %v782
        %v784 = vmul.f32 %v746, 1.442695
        %v785 = vpow.pop %v784
        %v786 = vmul.f32 %v747, 1.442695
        %v787 = vpow.pop %v786
        %v788 = vmul.f32 %v748, 1.442695
        %v789 = vpow.pop %v788
        %v790 = vmul.f32 %v749, 1.442695
        %v791 = vpow.pop %v790
        %v792 = vmul.f32 %v750, 1.442695
        %v793 = vpow.pop %v792
        %v794 = vmul.f32 %v751, 1.442695
        %v795 = vpow.pop %v794
        %v796 = vmul.f32 %v752, 1.442695
        %v797 = vpow.pop %v796
        %v798 = vmul.f32 %v753, 1.442695
        %v799 = vpow.pop %v798
        %v800 = vmul.f32 %v754, 1.442695
        %v801 = vpow.pop %v800
        %v802 = vmul.f32 %v755, 1.442695
        %v803 = vpow.pop %v802
        %v804 = vmul.f32 %v756, 1.442695
        %v805 = vpow.pop %v804
        %v806 = vmul.f32 %v757, 1.442695
        %v807 = vpow.pop %v806
        %v808 = vmul.f32 %v758, 1.442695
        %v809 = vpow.pop %v808
        %v810 = vmul.f32 %v759, 1.442695
        %v811 = vpow.pop %v810
        %v812 = vmul.f32 %v760, 1.442695
        %v813 = vpow.pop %v812
        %v814 = vmul.f32 %v761, 1.442695
        %v815 = vpow.pop %v814
        %v816 = vmul.f32 %v762, 1.442695
        %v817 = vpow.pop %v816
        %v818 = vmul.f32 %v763, 1.442695
        %v819 = vpow.pop %v818
        %v820 = vmul.f32 %v764, 1.442695
        %v821 = vpow.pop %v820
        %v822 = vmul.f32 %v765, 1.442695
        %v823 = vpow.pop %v822
        %v824 = vmul.f32 %v766, 1.442695
        %v825 = vpow.pop %v824
        %v826 = vmul.f32 %v767, 1.442695
        %v827 = vpow.pop %v826
        %v828 = vmul.f32 %v768, 1.442695
        %v829 = vpow.pop %v828
        %v830 = vmul.f32 %v769, 1.442695
        %v831 = vpow.pop %v830
        %v832 = vmul.f32 %v770, 1.442695
        %v833 = vpow.pop %v832
        %v834 = vmul.f32 %v771, 1.442695
        %v835 = vpow.pop %v834
        %836 = vadd.xlane.f32.xlu0 %v773
        %v837 = vpop.xlane.xlu0 %836
        %838 = vadd.xlane.f32.xlu0 %v775
        %v839 = vpop.xlane.xlu0 %838
        %840 = vadd.xlane.f32.xlu0 %v777
        %v841 = vpop.xlane.xlu0 %840
        %842 = vadd.xlane.f32.xlu0 %v779
        %v843 = vpop.xlane.xlu0 %842
        %844 = vadd.xlane.f32.xlu0 %v781
        %v845 = vpop.xlane.xlu0 %844
        %846 = vadd.xlane.f32.xlu0 %v783
        %v847 = vpop.xlane.xlu0 %846
        %848 = vadd.xlane.f32.xlu0 %v785
        %v849 = vpop.xlane.xlu0 %848
        %850 = vadd.xlane.f32.xlu0 %v787
        %v851 = vpop.xlane.xlu0 %850
        %852 = vadd.xlane.f32.xlu0 %v789
        %v853 = vpop.xlane.xlu0 %852
        %854 = vadd.xlane.f32.xlu0 %v791
        %v855 = vpop.xlane.xlu0 %854
        %856 = vadd.xlane.f32.xlu0 %v793
        %v857 = vpop.xlane.xlu0 %856
        %858 = vadd.xlane.f32.xlu0 %v795
        %v859 = vpop.xlane.xlu0 %858
        %860 = vadd.xlane.f32.xlu0 %v797
        %v861 = vpop.xlane.xlu0 %860
        %862 = vadd.xlane.f32.xlu0 %v799
        %v863 = vpop.xlane.xlu0 %862
        %864 = vadd.xlane.f32.xlu0 %v801
        %v865 = vpop.xlane.xlu0 %864
        %866 = vadd.xlane.f32.xlu0 %v803
        %v867 = vpop.xlane.xlu0 %866
        %868 = vadd.xlane.f32.xlu0 %v805
        %v869 = vpop.xlane.xlu0 %868
        %870 = vadd.xlane.f32.xlu0 %v807
        %v871 = vpop.xlane.xlu0 %870
        %872 = vadd.xlane.f32.xlu0 %v809
        %v873 = vpop.xlane.xlu0 %872
        %874 = vadd.xlane.f32.xlu0 %v811
        %v875 = vpop.xlane.xlu0 %874
        %876 = vadd.xlane.f32.xlu0 %v813
        %v877 = vpop.xlane.xlu0 %876
        %878 = vadd.xlane.f32.xlu0 %v815
        %v879 = vpop.xlane.xlu0 %878
        %880 = vadd.xlane.f32.xlu0 %v817
        %v881 = vpop.xlane.xlu0 %880
        %882 = vadd.xlane.f32.xlu0 %v819
        %v883 = vpop.xlane.xlu0 %882
        %884 = vadd.xlane.f32.xlu0 %v821
        %v885 = vpop.xlane.xlu0 %884
        %886 = vadd.xlane.f32.xlu0 %v823
        %v887 = vpop.xlane.xlu0 %886
        %888 = vadd.xlane.f32.xlu0 %v825
        %v889 = vpop.xlane.xlu0 %888
        %890 = vadd.xlane.f32.xlu0 %v827
        %v891 = vpop.xlane.xlu0 %890
        %892 = vadd.xlane.f32.xlu0 %v829
        %v893 = vpop.xlane.xlu0 %892
        %894 = vadd.xlane.f32.xlu0 %v831
        %v895 = vpop.xlane.xlu0 %894
        %896 = vadd.xlane.f32.xlu0 %v833
        %v897 = vpop.xlane.xlu0 %896
        %898 = vadd.xlane.f32.xlu0 %v835
        %v899 = vpop.xlane.xlu0 %898
        %v900 = vrcp.pop %v837
        %v901 = vmul.f32 1.0, %v900
        %v902 = vrcp.pop %v839
        %v903 = vmul.f32 1.0, %v902
        %v904 = vrcp.pop %v841
        %v905 = vmul.f32 1.0, %v904
        %v906 = vrcp.pop %v843
        %v907 = vmul.f32 1.0, %v906
        %v908 = vrcp.pop %v845
        %v909 = vmul.f32 1.0, %v908
        %v910 = vrcp.pop %v847
        %v911 = vmul.f32 1.0, %v910
        %v912 = vrcp.pop %v849
        %v913 = vmul.f32 1.0, %v912
        %v914 = vrcp.pop %v851
        %v915 = vmul.f32 1.0, %v914
        %v916 = vrcp.pop %v853
        %v917 = vmul.f32 1.0, %v916
        %v918 = vrcp.pop %v855
        %v919 = vmul.f32 1.0, %v918
        %v920 = vrcp.pop %v857
        %v921 = vmul.f32 1.0, %v920
        %v922 = vrcp.pop %v859
        %v923 = vmul.f32 1.0, %v922
        %v924 = vrcp.pop %v861
        %v925 = vmul.f32 1.0, %v924
        %v926 = vrcp.pop %v863
        %v927 = vmul.f32 1.0, %v926
        %v928 = vrcp.pop %v865
        %v929 = vmul.f32 1.0, %v928
        %v930 = vrcp.pop %v867
        %v931 = vmul.f32 1.0, %v930
        %v932 = vrcp.pop %v869
        %v933 = vmul.f32 1.0, %v932
        %v934 = vrcp.pop %v871
        %v935 = vmul.f32 1.0, %v934
        %v936 = vrcp.pop %v873
        %v937 = vmul.f32 1.0, %v936
        %v938 = vrcp.pop %v875
        %v939 = vmul.f32 1.0, %v938
        %v940 = vrcp.pop %v877
        %v941 = vmul.f32 1.0, %v940
        %v942 = vrcp.pop %v879
        %v943 = vmul.f32 1.0, %v942
        %v944 = vrcp.pop %v881
        %v945 = vmul.f32 1.0, %v944
        %v946 = vrcp.pop %v883
        %v947 = vmul.f32 1.0, %v946
        %v948 = vrcp.pop %v885
        %v949 = vmul.f32 1.0, %v948
        %v950 = vrcp.pop %v887
        %v951 = vmul.f32 1.0, %v950
        %v952 = vrcp.pop %v889
        %v953 = vmul.f32 1.0, %v952
        %v954 = vrcp.pop %v891
        %v955 = vmul.f32 1.0, %v954
        %v956 = vrcp.pop %v893
        %v957 = vmul.f32 1.0, %v956
        %v958 = vrcp.pop %v895
        %v959 = vmul.f32 1.0, %v958
        %v960 = vrcp.pop %v897
        %v961 = vmul.f32 1.0, %v960
        %v962 = vrcp.pop %v899
        %v963 = vmul.f32 1.0, %v962
        %v964 = vmul.f32 %v773, %v901
        %v965 = vmul.f32 %v775, %v903
        %v966 = vmul.f32 %v777, %v905
        %v967 = vmul.f32 %v779, %v907
        %v968 = vmul.f32 %v781, %v909
        %v969 = vmul.f32 %v783, %v911
        %v970 = vmul.f32 %v785, %v913
        %v971 = vmul.f32 %v787, %v915
        %v972 = vmul.f32 %v789, %v917
        %v973 = vmul.f32 %v791, %v919
        %v974 = vmul.f32 %v793, %v921
        %v975 = vmul.f32 %v795, %v923
        %v976 = vmul.f32 %v797, %v925
        %v977 = vmul.f32 %v799, %v927
        %v978 = vmul.f32 %v801, %v929
        %v979 = vmul.f32 %v803, %v931
        %v980 = vmul.f32 %v805, %v933
        %v981 = vmul.f32 %v807, %v935
        %v982 = vmul.f32 %v809, %v937
        %v983 = vmul.f32 %v811, %v939
        %v984 = vmul.f32 %v813, %v941
        %v985 = vmul.f32 %v815, %v943
        %v986 = vmul.f32 %v817, %v945
        %v987 = vmul.f32 %v819, %v947
        %v988 = vmul.f32 %v821, %v949
        %v989 = vmul.f32 %v823, %v951
        %v990 = vmul.f32 %v825, %v953
        %v991 = vmul.f32 %v827, %v955
        %v992 = vmul.f32 %v829, %v957
        %v993 = vmul.f32 %v831, %v959
        %v994 = vmul.f32 %v833, %v961
        %v995 = vmul.f32 %v835, %v963
        %v996 = vpack.c.bf16 %v965, %v964
        %v997 = vpack.c.bf16 %v967, %v966
        %v998 = vpack.c.bf16 %v969, %v968
        %v999 = vpack.c.bf16 %v971, %v970
        %v1000 = vpack.c.bf16 %v973, %v972
        %v1001 = vpack.c.bf16 %v975, %v974
        %v1002 = vpack.c.bf16 %v977, %v976
        %v1003 = vpack.c.bf16 %v979, %v978
        %v1004 = vpack.c.bf16 %v981, %v980
        %v1005 = vpack.c.bf16 %v983, %v982
        %v1006 = vpack.c.bf16 %v985, %v984
        %v1007 = vpack.c.bf16 %v987, %v986
        %v1008 = vpack.c.bf16 %v989, %v988
        %v1009 = vpack.c.bf16 %v991, %v990
        %v1010 = vpack.c.bf16 %v993, %v992
        %v1011 = vpack.c.bf16 %v995, %v994
        %1012 = vmatprep.subr.bf16.mxu0 0
        %1013 = vmatpush1.bf16.msra.mxu0 %v667
        %1014 = vmatprep.subr.bf16.mxu0 0
        %1015 = vmatpush1.bf16.msra.mxu0 %v666
        %1016 = vmatprep.subr.bf16.mxu0 0
        %1017 = vmatpush1.bf16.msra.mxu0 %v665
        %1018 = vmatprep.subr.bf16.mxu0 0
        %1019 = vmatpush1.bf16.msra.mxu0 %v664
        %1020 = vmatprep.subr.bf16.mxu0 0
        %1021 = vmatpush1.bf16.msra.mxu0 %v663
        %1022 = vmatprep.subr.bf16.mxu0 0
        %1023 = vmatpush1.bf16.msra.mxu0 %v662
        %1024 = vmatprep.subr.bf16.mxu0 0
        %1025 = vmatpush1.bf16.msra.mxu0 %v661
        %1026 = vmatprep.subr.bf16.mxu0 0
        %1027 = vmatpush1.bf16.msra.mxu0 %v660
        %1028 = vmatprep.subr.bf16.mxu0 0
        %1029 = vmatpush2.bf16.msra.mxu0 0
        %1030 = vmatprep.subr.bf16.mxu0 0
        %1031 = vmatpush2.bf16.msra.mxu0 0
        %1032 = vmatprep.subr.bf16.mxu0 0
        %1033 = vmatpush2.bf16.msra.mxu0 0
        %1034 = vmatprep.subr.bf16.mxu0 0
        %1035 = vmatpush2.bf16.msra.mxu0 0
        %1036 = vmatprep.subr.bf16.mxu0 0
        %1037 = vmatpush2.bf16.msra.mxu0 0
        %1038 = vmatprep.subr.bf16.mxu0 0
        %1039 = vmatpush2.bf16.msra.mxu0 0
        %1040 = vmatprep.subr.bf16.mxu0 0
        %1041 = vmatpush2.bf16.msra.mxu0 0
        %1042 = vmatprep.subr.bf16.mxu0 0
        %1043 = vmatpush2.bf16.msra.mxu0 0
        %1044 = vmatprep.mubr.bf16.mxu0 0
        %1045 = vmatmul.mubr.bf16.gmra.mxu0 %v996
        %v1046 = vpop.f32.mrf.mxu0
        %v1047 = vadd.f32 0.0, %v1046
        %v1048 = vpop.f32.mrf.mxu0
        %v1049 = vpop.f32.mrf.mxu0
        %v1050 = vadd.f32 0.0, %v1049
        %v1051 = vpop.f32.mrf.mxu0
        %1052 = vmatprep.mubr.bf16.mxu0 0
        %1053 = vmatmul.mubr.bf16.gmra.mxu0 %v997
        %v1054 = vpop.f32.mrf.mxu0
        %v1055 = vadd.f32 0.0, %v1054
        %v1056 = vpop.f32.mrf.mxu0
        %v1057 = vpop.f32.mrf.mxu0
        %v1058 = vadd.f32 0.0, %v1057
        %v1059 = vpop.f32.mrf.mxu0
        %1060 = vmatprep.mubr.bf16.mxu0 0
        %1061 = vmatmul.mubr.bf16.gmra.mxu0 %v998
        %v1062 = vpop.f32.mrf.mxu0
        %v1063 = vadd.f32 0.0, %v1062
        %v1064 = vpop.f32.mrf.mxu0
        %v1065 = vpop.f32.mrf.mxu0
        %v1066 = vadd.f32 0.0, %v1065
        %v1067 = vpop.f32.mrf.mxu0
        %1068 = vmatprep.mubr.bf16.mxu0 0
        %1069 = vmatmul.mubr.bf16.gmra.mxu0 %v999
        %v1070 = vpop.f32.mrf.mxu0
        %v1071 = vadd.f32 0.0, %v1070
        %v1072 = vpop.f32.mrf.mxu0
        %v1073 = vpop.f32.mrf.mxu0
        %v1074 = vadd.f32 0.0, %v1073
        %v1075 = vpop.f32.mrf.mxu0
        %1076 = vmatprep.mubr.bf16.mxu0 0
        %1077 = vmatmul.mubr.bf16.gmra.mxu0 %v1000
        %v1078 = vpop.f32.mrf.mxu0
        %v1079 = vadd.f32 0.0, %v1078
        %v1080 = vpop.f32.mrf.mxu0
        %v1081 = vpop.f32.mrf.mxu0
        %v1082 = vadd.f32 0.0, %v1081
        %v1083 = vpop.f32.mrf.mxu0
        %1084 = vmatprep.mubr.bf16.mxu0 0
        %1085 = vmatmul.mubr.bf16.gmra.mxu0 %v1001
        %v1086 = vpop.f32.mrf.mxu0
        %v1087 = vadd.f32 0.0, %v1086
        %v1088 = vpop.f32.mrf.mxu0
        %v1089 = vpop.f32.mrf.mxu0
        %v1090 = vadd.f32 0.0, %v1089
        %v1091 = vpop.f32.mrf.mxu0
        %1092 = vmatprep.mubr.bf16.mxu0 0
        %1093 = vmatmul.mubr.bf16.gmra.mxu0 %v1002
        %v1094 = vpop.f32.mrf.mxu0
        %v1095 = vadd.f32 0.0, %v1094
        %v1096 = vpop.f32.mrf.mxu0
        %v1097 = vpop.f32.mrf.mxu0
        %v1098 = vadd.f32 0.0, %v1097
        %v1099 = vpop.f32.mrf.mxu0
        %1100 = vmatprep.mubr.bf16.mxu0 0
        %1101 = vmatmul.mubr.bf16.gmra.mxu0 %v1003
        %v1102 = vpop.f32.mrf.mxu0
        %v1103 = vadd.f32 0.0, %v1102
        %v1104 = vpop.f32.mrf.mxu0
        %v1105 = vpop.f32.mrf.mxu0
        %v1106 = vadd.f32 0.0, %v1105
        %v1107 = vpop.f32.mrf.mxu0
        %1108 = vdwg.mxu0
        %1109 = vmatprep.subr.bf16.mxu0 0
        %1110 = vmatpush1.bf16.msra.mxu0 %v675
        %1111 = vmatprep.subr.bf16.mxu0 0
        %1112 = vmatpush1.bf16.msra.mxu0 %v674
        %1113 = vmatprep.subr.bf16.mxu0 0
        %1114 = vmatpush1.bf16.msra.mxu0 %v673
        %1115 = vmatprep.subr.bf16.mxu0 0
        %1116 = vmatpush1.bf16.msra.mxu0 %v672
        %1117 = vmatprep.subr.bf16.mxu0 0
        %1118 = vmatpush1.bf16.msra.mxu0 %v671
        %1119 = vmatprep.subr.bf16.mxu0 0
        %1120 = vmatpush1.bf16.msra.mxu0 %v670
        %1121 = vmatprep.subr.bf16.mxu0 0
        %1122 = vmatpush1.bf16.msra.mxu0 %v669
        %1123 = vmatprep.subr.bf16.mxu0 0
        %1124 = vmatpush1.bf16.msra.mxu0 %v668
        %1125 = vmatprep.subr.bf16.mxu0 0
        %1126 = vmatpush2.bf16.msra.mxu0 0
        %1127 = vmatprep.subr.bf16.mxu0 0
        %1128 = vmatpush2.bf16.msra.mxu0 0
        %1129 = vmatprep.subr.bf16.mxu0 0
        %1130 = vmatpush2.bf16.msra.mxu0 0
        %1131 = vmatprep.subr.bf16.mxu0 0
        %1132 = vmatpush2.bf16.msra.mxu0 0
        %1133 = vmatprep.subr.bf16.mxu0 0
        %1134 = vmatpush2.bf16.msra.mxu0 0
        %1135 = vmatprep.subr.bf16.mxu0 0
        %1136 = vmatpush2.bf16.msra.mxu0 0
        %1137 = vmatprep.subr.bf16.mxu0 0
        %1138 = vmatpush2.bf16.msra.mxu0 0
        %1139 = vmatprep.subr.bf16.mxu0 0
        %1140 = vmatpush2.bf16.msra.mxu0 0
        %1141 = vmatprep.mubr.bf16.mxu0 0
        %1142 = vmatmul.mubr.bf16.gmra.mxu0 %v1004
        %v1143 = vpop.f32.mrf.mxu0
        %v1144 = vadd.f32 0.0, %v1143
        %v1145 = vpop.f32.mrf.mxu0
        %v1146 = vpop.f32.mrf.mxu0
        %v1147 = vadd.f32 0.0, %v1146
        %v1148 = vpop.f32.mrf.mxu0
        %1149 = vmatprep.mubr.bf16.mxu0 0
        %1150 = vmatmul.mubr.bf16.gmra.mxu0 %v1005
        %v1151 = vpop.f32.mrf.mxu0
        %v1152 = vadd.f32 0.0, %v1151
        %v1153 = vpop.f32.mrf.mxu0
        %v1154 = vpop.f32.mrf.mxu0
        %v1155 = vadd.f32 0.0, %v1154
        %v1156 = vpop.f32.mrf.mxu0
        %1157 = vmatprep.mubr.bf16.mxu0 0
        %1158 = vmatmul.mubr.bf16.gmra.mxu0 %v1006
        %v1159 = vpop.f32.mrf.mxu0
        %v1160 = vadd.f32 0.0, %v1159
        %v1161 = vpop.f32.mrf.mxu0
        %v1162 = vpop.f32.mrf.mxu0
        %v1163 = vadd.f32 0.0, %v1162
        %v1164 = vpop.f32.mrf.mxu0
        %1165 = vmatprep.mubr.bf16.mxu0 0
        %1166 = vmatmul.mubr.bf16.gmra.mxu0 %v1007
        %v1167 = vpop.f32.mrf.mxu0
        %v1168 = vadd.f32 0.0, %v1167
        %v1169 = vpop.f32.mrf.mxu0
        %v1170 = vpop.f32.mrf.mxu0
        %v1171 = vadd.f32 0.0, %v1170
        %v1172 = vpop.f32.mrf.mxu0
        %1173 = vmatprep.mubr.bf16.mxu0 0
        %1174 = vmatmul.mubr.bf16.gmra.mxu0 %v1008
        %v1175 = vpop.f32.mrf.mxu0
        %v1176 = vadd.f32 0.0, %v1175
        %v1177 = vpop.f32.mrf.mxu0
        %v1178 = vpop.f32.mrf.mxu0
        %v1179 = vadd.f32 0.0, %v1178
        %v1180 = vpop.f32.mrf.mxu0
        %1181 = vmatprep.mubr.bf16.mxu0 0
        %1182 = vmatmul.mubr.bf16.gmra.mxu0 %v1009
        %v1183 = vpop.f32.mrf.mxu0
        %v1184 = vadd.f32 0.0, %v1183
        %v1185 = vpop.f32.mrf.mxu0
        %v1186 = vpop.f32.mrf.mxu0
        %v1187 = vadd.f32 0.0, %v1186
        %v1188 = vpop.f32.mrf.mxu0
        %1189 = vmatprep.mubr.bf16.mxu0 0
        %1190 = vmatmul.mubr.bf16.gmra.mxu0 %v1010
        %v1191 = vpop.f32.mrf.mxu0
        %v1192 = vadd.f32 0.0, %v1191
        %v1193 = vpop.f32.mrf.mxu0
        %v1194 = vpop.f32.mrf.mxu0
        %v1195 = vadd.f32 0.0, %v1194
        %v1196 = vpop.f32.mrf.mxu0
        %1197 = vmatprep.mubr.bf16.mxu0 0
        %1198 = vmatmul.mubr.bf16.gmra.mxu0 %v1011
        %v1199 = vpop.f32.mrf.mxu0
        %v1200 = vadd.f32 0.0, %v1199
        %v1201 = vpop.f32.mrf.mxu0
        %v1202 = vpop.f32.mrf.mxu0
        %v1203 = vadd.f32 0.0, %v1202
        %v1204 = vpop.f32.mrf.mxu0
        %1205 = vdwg.mxu0
        %1206 = vst [vmem:[%s268] sm:$0xff] %v1047
        %1207 = vst [vmem:[%s268 + $0x8] sm:$0xff] %v1050
        %1208 = vst [vmem:[%s268 + $0x10] sm:$0xff] %v1055
        %1209 = vst [vmem:[%s268 + $0x18] sm:$0xff] %v1058
        %1210 = vst [vmem:[%s268 + $0x20] sm:$0xff] %v1063
        %1211 = vst [vmem:[%s268 + $0x28] sm:$0xff] %v1066
        %1212 = vst [vmem:[%s268 + $0x30] sm:$0xff] %v1071
        %1213 = vst [vmem:[%s268 + $0x38] sm:$0xff] %v1074
        %1214 = vst [vmem:[%s268 + $0x40] sm:$0xff] %v1079
        %1215 = vst [vmem:[%s268 + $0x48] sm:$0xff] %v1082
        %1216 = vst [vmem:[%s268 + $0x50] sm:$0xff] %v1087
        %1217 = vst [vmem:[%s268 + $0x58] sm:$0xff] %v1090
        %1218 = vst [vmem:[%s268 + $0x60] sm:$0xff] %v1095
        %1219 = vst [vmem:[%s268 + $0x68] sm:$0xff] %v1098
        %1220 = vst [vmem:[%s268 + $0x70] sm:$0xff] %v1103
        %1221 = vst [vmem:[%s268 + $0x78] sm:$0xff] %v1106
        %1222 = vst [vmem:[%s268 + $0x80] sm:$0xff] %v1144
        %1223 = vst [vmem:[%s268 + $0x88] sm:$0xff] %v1147
        %1224 = vst [vmem:[%s268 + $0x90] sm:$0xff] %v1152
        %1225 = vst [vmem:[%s268 + $0x98] sm:$0xff] %v1155
        %1226 = vst [vmem:[%s268 + $0xa0] sm:$0xff] %v1160
        %1227 = vst [vmem:[%s268 + $0xa8] sm:$0xff] %v1163
        %1228 = vst [vmem:[%s268 + $0xb0] sm:$0xff] %v1168
        %1229 = vst [vmem:[%s268 + $0xb8] sm:$0xff] %v1171
        %1230 = vst [vmem:[%s268 + $0xc0] sm:$0xff] %v1176
        %1231 = vst [vmem:[%s268 + $0xc8] sm:$0xff] %v1179
        %1232 = vst [vmem:[%s268 + $0xd0] sm:$0xff] %v1184
        %1233 = vst [vmem:[%s268 + $0xd8] sm:$0xff] %v1187
        %1234 = vst [vmem:[%s268 + $0xe0] sm:$0xff] %v1192
        %1235 = vst [vmem:[%s268 + $0xe8] sm:$0xff] %v1195
        %1236 = vst [vmem:[%s268 + $0xf0] sm:$0xff] %v1200
        %1237 = vst [vmem:[%s268 + $0xf8] sm:$0xff] %v1203
        %s1238 = sand.u32 %s109, 1
        %s1239 = scalar_lea.sflag [#allocation4], %s1238
        %s1240 = sand.u32 %s109, 1
        %s1241 = smul.addr %s1240, 256
        %s1242 = scalar_lea.vmem [#allocation8], %s1241
        // Predicated region
        $region45: #{tpu_custom_call.1} parent=31 // pred_check
          %p1243 = pneg %p119
        $region46: #{tpu_custom_call.1} parent=31 // pred_check_branch
          %1245 = sbr.rel (%p1243) target = $region48
        $region47: #{tpu_custom_call.1} parent=31 // pred_region
          %s1246 = smul.u32 2, %s23
          %s1248 = ssub.s32 4096, 4096
          %1249 = vsyncadd %s1239, %s1248
          %s1250 = smul.addr %s1246, 16
          %s1251 = smul.addr %s1250, 128
          %s1252 = scalar_lea.hbm %s3, %s1251
          %s1253 = sshll.u32 %s1242, 4
          %s1254 = int_to_ptr.vmem [resolvable:$true] %s1253
          %1259 = dma.vmem_to_hbm [thread:$0]  %s1254, 4096, %s1252, %s1239, 128, 128, 8
        $region48: #{tpu_custom_call.1} parent=31 // pred_fallthru
          _
      $region32: #{tpu_custom_call.1} parent=5 // pred_fallthru
        _
      %p1260 = scmp.le.s32.totalorder 2, %s18
      // Predicated region
      $region49: #{tpu_custom_call.1} parent=5 // pred_check
        %p1261 = pneg %p1260
      $region50: #{tpu_custom_call.1} parent=5 // pred_check_branch
        %1263 = sbr.rel (%p1261) target = $region52
      $region51: #{tpu_custom_call.1} parent=5 // pred_region
        %s1264 = ssub.s32 %s18, 2
        // Predicated region
        $region53: #{tpu_custom_call.1} parent=51 // pred_check
          %p1265 = pneg %p125
        $region54: #{tpu_custom_call.1} parent=51 // pred_check_branch
          %1267 = sbr.rel (%p1265) target = $region56
        $region55: #{tpu_custom_call.1} parent=51 // pred_region
          %s1268 = sand.u32 %s110, 1
          %s1269 = scalar_lea.sflag [#allocation4], %s1268
          %s1270 = sand.u32 %s110, 1
          %s1271 = smul.addr %s1270, 256
          %s1272 = scalar_lea.vmem [#allocation8], %s1271
          %1273 = dma.done %s1269, 4096
        $region56: #{tpu_custom_call.1} parent=51 // pred_fallthru
          _
      $region52: #{tpu_custom_call.1} parent=5 // pred_fallthru
        _
    $region6: #{tpu_custom_call.1} parent=1 // loop_footer
      %s22 = sadd.s32 1, %s18
    $region7: #{tpu_custom_call.1} parent=1 // loop_footer_branch
      %17 = sbr.rel target = $region3
    $region8: #{tpu_custom_call.1} parent=1 // loop_exit
      _
    %1274 = vsyncpa [#allocation3], 1
    %s1275 = scalar_lea.sflag [#allocation3], 1
    %1276 = vsyncpa %s1275, 1
    %1277 = vsyncpa [#allocation6], 1
    %s1278 = scalar_lea.sflag [#allocation6], 1
    %1279 = vsyncpa %s1278, 1
    %1280 = vsyncpa [#allocation4], 1
    %s1281 = scalar_lea.sflag [#allocation4], 1
    %1282 = vsyncpa %s1281, 1

</llo_original>
